<compile_context>
chip_gen: v5e
topology: v5e:2x2
jax: 0.10.0
libtpu: 0.0.40
codegen_flags: <defaults>
</compile_context>

<pallas_src>
import jax
import jax.numpy as jnp
from jax import lax
from jax.experimental import pallas as pl
from jax.experimental.pallas import tpu as pltpu

NEG_SLOPE = 0.01
ALIGN_B = 256     # batch-tile alignment: MXU-friendly, lane-dense, bf16-pack safe
HEAD_ROWS = 8     # head weight padded to 8 sublane rows (row 0 is the real head)


def _leaky_relu(x, negative_slope=NEG_SLOPE):
    return jnp.where(x > 0, x, negative_slope * x)


def _round_up(x, m):
    return ((x + m - 1) // m) * m


def almodel_kernel(x_ref, w1_ref, b1_ref, w2_ref, b2_ref, w3t_ref, b3_ref, o_ref):
    """Fused 3-linear-layer MLP forward for one batch tile.

    x_ref  : (TB, D0)
    w1     : (D0, D1), w2 : (D1, D2)                  (pre-transposed, masks folded)
    w3t    : (HEAD_ROWS, D2)  -- row 0 == head weight^T (mask folded), rest zero
    b1     : (1, D1),  b2 : (1, D2),  b3 : (1, 1)     (f32)
    o_ref  : (1, 1, TB) f32  -- per-row scalar packed on the lane axis
    """
    # Layer 1: Linear -> LeakyReLU   (ConstDropout mask m1 folded into w2)
    h = jnp.dot(x_ref[...], w1_ref[...], preferred_element_type=jnp.float32)
    h = _leaky_relu(h + b1_ref[...])

    # Layer 2: Linear -> LeakyReLU   (ConstDropout mask m2 folded into w3)
    h = jnp.dot(h.astype(w2_ref.dtype), w2_ref[...],
                preferred_element_type=jnp.float32)
    h = _leaky_relu(h + b2_ref[...])

    # Head: (8, D2) . (TB, D2)^T -> (8, TB); batch lands on the lane axis so the
    # store is a full-width lane-dense vst of exactly the useful scalars.
    s = lax.dot_general(w3t_ref[...], h.astype(w3t_ref.dtype),
                        dimension_numbers=(((1,), (1,)), ((), ())),
                        preferred_element_type=jnp.float32)
    o_ref[0] = _leaky_relu(s[0:1, :] + b3_ref[...]).astype(o_ref.dtype)


def _choose_tile_b(B, tile_b):
    """Align tile to 256 rows and keep >= 2 grid steps when the batch allows it."""
    B_al = _round_up(max(B, 1), ALIGN_B)
    tile_b = max(ALIGN_B, min(_round_up(tile_b, ALIGN_B), B_al))
    if B_al >= 2 * ALIGN_B:
        # Cap so the "parallel" axis has >= 2 steps (v7x dual-TensorCore sharding).
        tile_b = min(tile_b, _round_up(B_al // 2, ALIGN_B))
    return tile_b


def almodel_forward(x, params, *, tile_b=2048, use_bf16=False):
    """x: (B, D0) float32.  Returns (B, 1) float32."""
    B, D0 = x.shape
    w1, b1 = params["w1"], params["b1"]
    w2, b2 = params["w2"], params["b2"]
    w3, b3 = params["w3"], params["b3"]
    D1, D2 = w1.shape[1], w2.shape[1]

    # --- host-side prep -----------------------------------------------------
    # Fold frozen ConstDropout masks into the following layer's weights.
    m1 = params.get("m1")
    m2 = params.get("m2")
    if m1 is not None:
        w2 = w2 * m1.reshape(D1, 1)
    if m2 is not None:
        w3 = w3 * m2.reshape(D2, 1)

    # Head weight transposed to (1, D2), padded to 8 sublane rows (rows 1..7 zero).
    w3t = jnp.zeros((HEAD_ROWS, D2), jnp.float32).at[0, :].set(w3.reshape(D2))

    b1 = b1.reshape(1, D1).astype(jnp.float32)
    b2 = b2.reshape(1, D2).astype(jnp.float32)
    b3 = b3.reshape(1, 1).astype(jnp.float32)

    if use_bf16:
        # bf16 streaming halves x's HBM read traffic (dominant after the output
        # fix); f32 MXU accumulation + f32 elementwise stay in the kernel.
        x = x.astype(jnp.bfloat16)
        w1, w2, w3t = (w1.astype(jnp.bfloat16), w2.astype(jnp.bfloat16),
                       w3t.astype(jnp.bfloat16))
    else:
        x = x.astype(jnp.float32)
        w1, w2 = w1.astype(jnp.float32), w2.astype(jnp.float32)

    # --- batch tiling ---------------------------------------------------------
    tile_b = _choose_tile_b(B, tile_b)
    B_pad = _round_up(B, tile_b)
    if B_pad != B:
        x = jnp.pad(x, ((0, B_pad - B), (0, 0)))
    n_tiles = B_pad // tile_b

    itemsize = 2 if use_bf16 else 4
    cost = pl.CostEstimate(
        flops=2 * B_pad * (D0 * D1 + D1 * D2 + HEAD_ROWS * D2),
        transcendentals=0,
        bytes_accessed=int(B_pad * D0 * itemsize                        # x
                           + (D0 * D1 + D1 * D2 + HEAD_ROWS * D2) * itemsize
                           + (D1 + D2 + 1) * 4                          # biases
                           + B_pad * 4))                                # output

    const = lambda i: (0, 0)  # weights/biases: same block every step (resident)

    out = pl.pallas_call(
        almodel_kernel,
        out_shape=jax.ShapeDtypeStruct((n_tiles, 1, tile_b), jnp.float32),
        grid_spec=pltpu.PrefetchScalarGridSpec(
            num_scalar_prefetch=0,
            grid=(n_tiles,),
            in_specs=[
                # x tile (only streamed input); depth-2 auto-pipelining hides its
                # DMA at these tile sizes — add pl.Buffered(3) only if xprof
                # shows exposed input DMA.
                pl.BlockSpec((tile_b, D0), lambda i: (i, 0)),
                pl.BlockSpec((D0, D1), const),          # w1
                pl.BlockSpec((1, D1), const),           # b1
                pl.BlockSpec((D1, D2), const),          # w2 (m1 folded in)
                pl.BlockSpec((1, D2), const),           # b2
                pl.BlockSpec((HEAD_ROWS, D2), const),   # w3^T padded (m2 folded in)
                pl.BlockSpec((1, 1), const),            # b3
            ],
            out_specs=pl.BlockSpec((1, 1, tile_b), lambda i: (i, 0, 0)),
        ),
        compiler_params=pltpu.CompilerParams(
            dimension_semantics=("parallel",)),
        cost_estimate=cost,
    )(x, w1, b1, w2, b2, w3t, b3)

    # (n_tiles, 1, tile_b) row-major == batch order; drop padding rows.
    return out.reshape(B_pad)[:B].reshape(B, 1)


def init_params(key, layers, p=0.05, frozen_masks=True):
    """Deterministic init matching torch.nn.Linear shapes (weights pre-transposed)."""
    assert len(layers) == 3, "demo builds ALModel(layers=[D0, D1, D2])"
    D0, D1, D2 = layers
    ks = jax.random.split(key, 8)

    def linear(kw, kb, fan_in, fan_out):
        bound = 1.0 / jnp.sqrt(fan_in)
        w = jax.random.uniform(kw, (fan_in, fan_out), jnp.float32, -bound, bound)
        b = jax.random.uniform(kb, (1, fan_out), jnp.float32, -bound, bound)
        return w, b

    w1, b1 = linear(ks[0], ks[1], D0, D1)
    w2, b2 = linear(ks[2], ks[3], D1, D2)
    w3, b3 = linear(ks[4], ks[5], D2, 1)

    if frozen_masks:
        # ConstDropout.set_const_mask(): Bernoulli(1-p) / (1-p), frozen.
        keep = 1.0 - p
        m1 = jax.random.bernoulli(ks[6], keep, (D1,)).astype(jnp.float32) / keep
        m2 = jax.random.bernoulli(ks[7], keep, (D2,)).astype(jnp.float32) / keep
    else:
        # eval-mode / unfrozen dropout == identity.
        m1 = jnp.ones((D1,), jnp.float32)
        m2 = jnp.ones((D2,), jnp.float32)

    return dict(w1=w1, b1=b1, m1=m1, w2=w2, b2=b2, m2=m2, w3=w3, b3=b3)


def almodel_reference(x, p):
    """Pure-JAX reference (unfused) for correctness checking."""
    h = _leaky_relu(x @ p["w1"] + p["b1"]) * p["m1"]
    h = _leaky_relu(h @ p["w2"] + p["b2"]) * p["m2"]
    return _leaky_relu(h @ p["w3"] + p["b3"])


if __name__ == "__main__":
    key = jax.random.PRNGKey(0)
    k_x, k_p = jax.random.split(key)

    layers = [32, 64, 32]   # ALModel(layers=[32, 64, 32]) -> head Linear(32, 1)
    B = 512                 # -> two 256-row tiles: exercises the multi-step grid

    x = jax.random.normal(k_x, (B, layers[0]), jnp.float32)
    params = init_params(k_p, layers, p=0.05, frozen_masks=True)
    ref = almodel_reference(x, params)

    # f32 path: tight check against the unfused reference.
    out = jax.block_until_ready(almodel_forward(x, params))
    assert out.shape == (B, 1), f"bad shape {out.shape}"
    assert jnp.allclose(out, ref, atol=1e-4, rtol=1e-4), "f32 mismatch vs reference"

    # bf16 streaming path (recommended for v5e/v6e inference): looser tolerance.
    out_bf16 = jax.block_until_ready(almodel_forward(x, params, use_bf16=True))
    assert out_bf16.shape == (B, 1)
    assert jnp.allclose(out_bf16, ref, atol=5e-2, rtol=5e-2), "bf16 mismatch vs reference"

    print("KERNEL_OK")
</pallas_src>

<mosaic_0001>
module attributes {stable_mosaic.version = 11 : i64} {
  func.func @almodel_kernel(%arg0: i32, %arg1: memref<256x32xf32, #tpu.memory_space<vmem>>, %arg2: memref<32x64xf32, #tpu.memory_space<vmem>>, %arg3: memref<1x64xf32, #tpu.memory_space<vmem>>, %arg4: memref<64x32xf32, #tpu.memory_space<vmem>>, %arg5: memref<1x32xf32, #tpu.memory_space<vmem>>, %arg6: memref<8x32xf32, #tpu.memory_space<vmem>>, %arg7: memref<1x1xf32, #tpu.memory_space<vmem>>, %arg8: memref<1x1x256xf32, #tpu.memory_space<vmem>>) attributes {dimension_semantics = [#tpu.dimension_semantics<parallel>], iteration_bounds = array<i64: 2>, scalar_prefetch = 0 : i64, scratch_operands = 0 : i64, tpu.core_type = #tpu.core_type<tc>, window_params = [{transform_indices = @transform_0, window_bounds = array<i64: 256, 32>}, {pipeline_mode = #tpu.pipeline_mode<synchronous>, transform_indices = @transform_1, window_bounds = array<i64: 32, 64>}, {pipeline_mode = #tpu.pipeline_mode<synchronous>, transform_indices = @transform_2, window_bounds = array<i64: 1, 64>}, {pipeline_mode = #tpu.pipeline_mode<synchronous>, transform_indices = @transform_3, window_bounds = array<i64: 64, 32>}, {pipeline_mode = #tpu.pipeline_mode<synchronous>, transform_indices = @transform_4, window_bounds = array<i64: 1, 32>}, {pipeline_mode = #tpu.pipeline_mode<synchronous>, transform_indices = @transform_5, window_bounds = array<i64: 8, 32>}, {pipeline_mode = #tpu.pipeline_mode<synchronous>, transform_indices = @transform_6, window_bounds = array<i64: 1, 1>}, {transform_indices = @transform_7, window_bounds = array<i64: 1, 1, 256>}]} {
    %c0 = arith.constant 0 : index
    %c0_0 = arith.constant 0 : index
    %0 = vector.load %arg1[%c0, %c0_0] : memref<256x32xf32, #tpu.memory_space<vmem>>, vector<256x32xf32>
    %c0_1 = arith.constant 0 : index
    %c0_2 = arith.constant 0 : index
    %1 = vector.load %arg2[%c0_1, %c0_2] : memref<32x64xf32, #tpu.memory_space<vmem>>, vector<32x64xf32>
    %cst = arith.constant dense<0.000000e+00> : vector<256x64xf32>
    %2 = tpu.matmul %0, %1, %cst {dimension_numbers = #tpu.dot_dimension_numbers<[1], [0], [0], [1], [0, 0, 1, 1], [], []>} : vector<256x32xf32>, vector<32x64xf32>, vector<256x64xf32> -> vector<256x64xf32>
    %c0_3 = arith.constant 0 : index
    %c0_4 = arith.constant 0 : index
    %3 = vector.load %arg3[%c0_3, %c0_4] : memref<1x64xf32, #tpu.memory_space<vmem>>, vector<1x64xf32>
    %4 = vector.broadcast %3 : vector<1x64xf32> to vector<256x64xf32>
    %5 = arith.addf %2, %4 : vector<256x64xf32>
    %cst_5 = arith.constant 0.000000e+00 : f32
    %6 = vector.broadcast %cst_5 : f32 to vector<256x64xf32>
    %7 = arith.cmpf ogt, %5, %6 : vector<256x64xf32>
    %cst_6 = arith.constant 0.00999999977 : f32
    %8 = vector.broadcast %cst_6 : f32 to vector<256x64xf32>
    %9 = arith.mulf %8, %5 : vector<256x64xf32>
    %10 = arith.select %7, %5, %9 : vector<256x64xi1>, vector<256x64xf32>
    %c0_7 = arith.constant 0 : index
    %c0_8 = arith.constant 0 : index
    %11 = vector.load %arg4[%c0_7, %c0_8] : memref<64x32xf32, #tpu.memory_space<vmem>>, vector<64x32xf32>
    %cst_9 = arith.constant dense<0.000000e+00> : vector<256x32xf32>
    %12 = tpu.matmul %10, %11, %cst_9 {dimension_numbers = #tpu.dot_dimension_numbers<[1], [0], [0], [1], [0, 0, 1, 1], [], []>} : vector<256x64xf32>, vector<64x32xf32>, vector<256x32xf32> -> vector<256x32xf32>
    %c0_10 = arith.constant 0 : index
    %c0_11 = arith.constant 0 : index
    %13 = vector.load %arg5[%c0_10, %c0_11] : memref<1x32xf32, #tpu.memory_space<vmem>>, vector<1x32xf32>
    %14 = vector.broadcast %13 : vector<1x32xf32> to vector<256x32xf32>
    %15 = arith.addf %12, %14 : vector<256x32xf32>
    %cst_12 = arith.constant 0.000000e+00 : f32
    %16 = vector.broadcast %cst_12 : f32 to vector<256x32xf32>
    %17 = arith.cmpf ogt, %15, %16 : vector<256x32xf32>
    %cst_13 = arith.constant 0.00999999977 : f32
    %18 = vector.broadcast %cst_13 : f32 to vector<256x32xf32>
    %19 = arith.mulf %18, %15 : vector<256x32xf32>
    %20 = arith.select %17, %15, %19 : vector<256x32xi1>, vector<256x32xf32>
    %c0_14 = arith.constant 0 : index
    %c0_15 = arith.constant 0 : index
    %21 = vector.load %arg6[%c0_14, %c0_15] : memref<8x32xf32, #tpu.memory_space<vmem>>, vector<8x32xf32>
    %cst_16 = arith.constant dense<0.000000e+00> : vector<8x256xf32>
    %22 = tpu.matmul %21, %20, %cst_16 {dimension_numbers = #tpu.dot_dimension_numbers<[1], [1], [0], [0], [0, 0, 1, 0], [], []>} : vector<8x32xf32>, vector<256x32xf32>, vector<8x256xf32> -> vector<8x256xf32>
    %23 = vector.extract_strided_slice %22 {offsets = [0, 0], sizes = [1, 256], strides = [1, 1]} : vector<8x256xf32> to vector<1x256xf32>
    %c0_17 = arith.constant 0 : index
    %c0_18 = arith.constant 0 : index
    %24 = vector.load %arg7[%c0_17, %c0_18] : memref<1x1xf32, #tpu.memory_space<vmem>>, vector<1x1xf32>
    %25 = vector.broadcast %24 : vector<1x1xf32> to vector<1x256xf32>
    %26 = arith.addf %23, %25 : vector<1x256xf32>
    %cst_19 = arith.constant 0.000000e+00 : f32
    %27 = vector.broadcast %cst_19 : f32 to vector<1x256xf32>
    %28 = arith.cmpf ogt, %26, %27 : vector<1x256xf32>
    %cst_20 = arith.constant 0.00999999977 : f32
    %29 = vector.broadcast %cst_20 : f32 to vector<1x256xf32>
    %30 = arith.mulf %29, %26 : vector<1x256xf32>
    %31 = arith.select %28, %26, %30 : vector<1x256xi1>, vector<1x256xf32>
    %c0_21 = arith.constant 0 : index
    %c0_22 = arith.constant 0 : index
    %c0_23 = arith.constant 0 : index
    %32 = vector.load %arg8[%c0_21, %c0_22, %c0_23] : memref<1x1x256xf32, #tpu.memory_space<vmem>>, vector<1x1x256xf32>
    %33 = vector.shape_cast %32 : vector<1x1x256xf32> to vector<1x256xf32>
    %34 = vector.shape_cast %31 : vector<1x256xf32> to vector<1x1x256xf32>
    tpu.vector_store %arg8[%c0_21, %c0_22, %c0_23], %34 {strides = array<i32>} : memref<1x1x256xf32, #tpu.memory_space<vmem>>, vector<1x1x256xf32>,
    return
  }
  func.func @transform_0(%arg0: i32) -> (i32, i32) {
    %c0_i32 = arith.constant 0 : i32
    %c0_i32_0 = arith.constant 0 : i32
    return %arg0, %c0_i32 : i32, i32
  }
  func.func @transform_1(%arg0: i32) -> (i32, i32) {
    %c0_i32 = arith.constant 0 : i32
    %c0_i32_0 = arith.constant 0 : i32
    %c0_i32_1 = arith.constant 0 : i32
    return %c0_i32, %c0_i32_0 : i32, i32
  }
  func.func @transform_2(%arg0: i32) -> (i32, i32) {
    %c0_i32 = arith.constant 0 : i32
    %c0_i32_0 = arith.constant 0 : i32
    %c0_i32_1 = arith.constant 0 : i32
    return %c0_i32, %c0_i32_0 : i32, i32
  }
  func.func @transform_3(%arg0: i32) -> (i32, i32) {
    %c0_i32 = arith.constant 0 : i32
    %c0_i32_0 = arith.constant 0 : i32
    %c0_i32_1 = arith.constant 0 : i32
    return %c0_i32, %c0_i32_0 : i32, i32
  }
  func.func @transform_4(%arg0: i32) -> (i32, i32) {
    %c0_i32 = arith.constant 0 : i32
    %c0_i32_0 = arith.constant 0 : i32
    %c0_i32_1 = arith.constant 0 : i32
    return %c0_i32, %c0_i32_0 : i32, i32
  }
  func.func @transform_5(%arg0: i32) -> (i32, i32) {
    %c0_i32 = arith.constant 0 : i32
    %c0_i32_0 = arith.constant 0 : i32
    %c0_i32_1 = arith.constant 0 : i32
    return %c0_i32, %c0_i32_0 : i32, i32
  }
  func.func @transform_6(%arg0: i32) -> (i32, i32) {
    %c0_i32 = arith.constant 0 : i32
    %c0_i32_0 = arith.constant 0 : i32
    %c0_i32_1 = arith.constant 0 : i32
    return %c0_i32, %c0_i32_0 : i32, i32
  }
  func.func @transform_7(%arg0: i32) -> (i32, i32, i32) {
    %c0_i32 = arith.constant 0 : i32
    %c0_i32_0 = arith.constant 0 : i32
    %c0_i32_1 = arith.constant 0 : i32
    return %arg0, %c0_i32, %c0_i32_0 : i32, i32, i32
  }
}

</mosaic_0001>

<llo_original>
// kernel: tpu_custom_call.1
$region0: #{tpu_custom_call.1}
  #allocation0 [shape = 'u32[]', space=smem, size = 0x4, offset = 0x4, fixed_abs, tag = 'smem constant byte address 0x4 - core index']
  #allocation1 [shape = 'u32[72,128]{1,0:T(1,128)}', space=vmem, size = 0x9000, scoped, tag = 'internal scratch']
  #allocation2 [shape = 'f32[1,1]{1,0:T(1,128)S(1)}', space=vmem, size = 0x200, scoped, tag = 'scoped memory for tpu_custom_call.1']
  %s0 = inlined_call_operand.vmem [shape: f32[512,32], index: 0, kind: input, shape index: {}]
  %s1 = inlined_call_operand.vmem [shape: f32[32,64], index: 1, kind: input, shape index: {}]
  %s2 = inlined_call_operand.vmem [shape: f32[1,64], index: 2, kind: input, shape index: {}]
  %s3 = inlined_call_operand.vmem [shape: f32[64,32], index: 3, kind: input, shape index: {}]
  %s4 = inlined_call_operand.vmem [shape: f32[1,32], index: 4, kind: input, shape index: {}]
  %s5 = inlined_call_operand.vmem [shape: f32[8,32], index: 5, kind: input, shape index: {}]
  %s6 = inlined_call_operand.<no memory space> [shape: f32[1,1], index: 6, kind: input, shape index: {}]
  %s7 = inlined_call_operand.hbm [shape: f32[2,1,256], index: 7, kind: output, shape index: {}]
  %s8 = sld [smem:[#allocation0]]
  $region61: #{tpu_custom_call.1} parent=0
    _
  %s10 = ssub.s32 1, %s8
  %s11 = scalar_select 0, %s10, %s8
  %v12 = vstv %s6
  %13 = vst [vmem:[#allocation2] sm:$0x1] %v12
  $region1: #{tpu_custom_call.1} parent=0
    #allocation3 [shape = 'u8[2048]{0}', space=vmem, size = 0x800, scoped, tag = 'output window, operand 0']
    #allocation4 [shape = 's32[2]{0}', space=sflag, size = 0x8, scoped, tag = 'scoped memory for tpu_custom_call.1']
    %14 = vsyncpa [#allocation4], 0
    %s15 = scalar_lea.sflag [#allocation4], 1
    %16 = vsyncpa %s15, 0
    loop: start=0, step=1, limit=4
    $region2: #{tpu_custom_call.1} parent=1 // loop_pre_header
      _
    $region3: #{tpu_custom_call.1} parent=1 // loop_header
      %s18 = sphi 0, %s22
      %p19 = scmp.ge.s32.totalorder %s18, 4
      %s28 = sphi 0, %s30
      %s31 = sphi 0, %s28
      %s32 = sphi 0, %s31
      %s48 = sphi 0, %s32
      %s52 = sphi 0, %s52
      %s54 = sphi 0, %s52
      %s55 = sphi 0, %s54
      %s69 = sphi 0, %s55
      %s73 = sphi 0, %s73
      %s75 = sphi 0, %s73
      %s76 = sphi 0, %s75
      %s90 = sphi 0, %s76
      %s94 = sphi 0, %s94
      %s96 = sphi 0, %s94
      %s97 = sphi 0, %s96
      %s111 = sphi 0, %s97
      %s115 = sphi 0, %s115
      %s117 = sphi 0, %s115
      %s118 = sphi 0, %s117
      %s132 = sphi 0, %s118
      %s136 = sphi 0, %s136
      %s138 = sphi 0, %s136
      %s139 = sphi 0, %s138
      %s153 = sphi 0, %s139
      %s157 = sphi 0, %s157
      %s159 = sphi 0, %s157
      %s160 = sphi 0, %s159
      %s174 = sphi 0, %s160
      %s180 = sphi 0, %s182
      %s183 = sphi 0, %s180
      %s184 = sphi 0, %s183
      %s200 = sphi 0, %s184
    $region4: #{tpu_custom_call.1} parent=1 // loop_header_branch
      %21 = sbr.rel (%p19) target = $region8
    $region5: #{tpu_custom_call.1} parent=1 // loop_body
      %s23 = ssub.s32 %s18, 1
      %s24 = ssub.s32 %s18, 2
      %s25 = sadd.s32 %s18, 1
      %s26 = ssub.s32 %s18, %s25
      %p27 = scmp.eq.s32.totalorder %s26, 0
      %s29 = sadd.s32 %s28, 1
      %s30 = scalar_select %p27, %s28, %s29
      %p33 = pneg %p27
      %p34 = scmp.eq.s32.totalorder %s18, 1
      %p35 = por %p33, %p34
      %p36 = scmp.ne.s32.totalorder %s28, %s31
      %p37 = scmp.eq.s32.totalorder %s18, 0
      %p38 = por %p36, %p37
      %p39 = scmp.ne.s32.totalorder %s28, %s31
      %p40 = scmp.eq.s32.totalorder %s23, 1
      %p41 = por %p39, %p40
      %p42 = scmp.ne.s32.totalorder %s31, %s32
      %p43 = scmp.eq.s32.totalorder %s23, 0
      %p44 = por %p42, %p43
      %p45 = scmp.ne.s32.totalorder %s31, %s32
      %p46 = scmp.eq.s32.totalorder %s24, 1
      %p47 = por %p45, %p46
      %p49 = scmp.ne.s32.totalorder %s32, %s48
      %p50 = scmp.eq.s32.totalorder %s24, 0
      %p51 = por %p49, %p50
      %s53 = sadd.s32 %s52, 1
      %p56 = scmp.eq.s32.totalorder %s18, 1
      %p57 = scmp.ne.s32.totalorder %s52, %s54
      %p58 = scmp.eq.s32.totalorder %s18, 0
      %p59 = por %p57, %p58
      %p60 = scmp.ne.s32.totalorder %s52, %s54
      %p61 = scmp.eq.s32.totalorder %s23, 1
      %p62 = por %p60, %p61
      %p63 = scmp.ne.s32.totalorder %s54, %s55
      %p64 = scmp.eq.s32.totalorder %s23, 0
      %p65 = por %p63, %p64
      %p66 = scmp.ne.s32.totalorder %s54, %s55
      %p67 = scmp.eq.s32.totalorder %s24, 1
      %p68 = por %p66, %p67
      %p70 = scmp.ne.s32.totalorder %s55, %s69
      %p71 = scmp.eq.s32.totalorder %s24, 0
      %p72 = por %p70, %p71
      %s74 = sadd.s32 %s73, 1
      %p77 = scmp.eq.s32.totalorder %s18, 1
      %p78 = scmp.ne.s32.totalorder %s73, %s75
      %p79 = scmp.eq.s32.totalorder %s18, 0
      %p80 = por %p78, %p79
      %p81 = scmp.ne.s32.totalorder %s73, %s75
      %p82 = scmp.eq.s32.totalorder %s23, 1
      %p83 = por %p81, %p82
      %p84 = scmp.ne.s32.totalorder %s75, %s76
      %p85 = scmp.eq.s32.totalorder %s23, 0
      %p86 = por %p84, %p85
      %p87 = scmp.ne.s32.totalorder %s75, %s76
      %p88 = scmp.eq.s32.totalorder %s24, 1
      %p89 = por %p87, %p88
      %p91 = scmp.ne.s32.totalorder %s76, %s90
      %p92 = scmp.eq.s32.totalorder %s24, 0
      %p93 = por %p91, %p92
      %s95 = sadd.s32 %s94, 1
      %p98 = scmp.eq.s32.totalorder %s18, 1
      %p99 = scmp.ne.s32.totalorder %s94, %s96
      %p100 = scmp.eq.s32.totalorder %s18, 0
      %p101 = por %p99, %p100
      %p102 = scmp.ne.s32.totalorder %s94, %s96
      %p103 = scmp.eq.s32.totalorder %s23, 1
      %p104 = por %p102, %p103
      %p105 = scmp.ne.s32.totalorder %s96, %s97
      %p106 = scmp.eq.s32.totalorder %s23, 0
      %p107 = por %p105, %p106
      %p108 = scmp.ne.s32.totalorder %s96, %s97
      %p109 = scmp.eq.s32.totalorder %s24, 1
      %p110 = por %p108, %p109
      %p112 = scmp.ne.s32.totalorder %s97, %s111
      %p113 = scmp.eq.s32.totalorder %s24, 0
      %p114 = por %p112, %p113
      %s116 = sadd.s32 %s115, 1
      %p119 = scmp.eq.s32.totalorder %s18, 1
      %p120 = scmp.ne.s32.totalorder %s115, %s117
      %p121 = scmp.eq.s32.totalorder %s18, 0
      %p122 = por %p120, %p121
      %p123 = scmp.ne.s32.totalorder %s115, %s117
      %p124 = scmp.eq.s32.totalorder %s23, 1
      %p125 = por %p123, %p124
      %p126 = scmp.ne.s32.totalorder %s117, %s118
      %p127 = scmp.eq.s32.totalorder %s23, 0
      %p128 = por %p126, %p127
      %p129 = scmp.ne.s32.totalorder %s117, %s118
      %p130 = scmp.eq.s32.totalorder %s24, 1
      %p131 = por %p129, %p130
      %p133 = scmp.ne.s32.totalorder %s118, %s132
      %p134 = scmp.eq.s32.totalorder %s24, 0
      %p135 = por %p133, %p134
      %s137 = sadd.s32 %s136, 1
      %p140 = scmp.eq.s32.totalorder %s18, 1
      %p141 = scmp.ne.s32.totalorder %s136, %s138
      %p142 = scmp.eq.s32.totalorder %s18, 0
      %p143 = por %p141, %p142
      %p144 = scmp.ne.s32.totalorder %s136, %s138
      %p145 = scmp.eq.s32.totalorder %s23, 1
      %p146 = por %p144, %p145
      %p147 = scmp.ne.s32.totalorder %s138, %s139
      %p148 = scmp.eq.s32.totalorder %s23, 0
      %p149 = por %p147, %p148
      %p150 = scmp.ne.s32.totalorder %s138, %s139
      %p151 = scmp.eq.s32.totalorder %s24, 1
      %p152 = por %p150, %p151
      %p154 = scmp.ne.s32.totalorder %s139, %s153
      %p155 = scmp.eq.s32.totalorder %s24, 0
      %p156 = por %p154, %p155
      %s158 = sadd.s32 %s157, 1
      %p161 = scmp.eq.s32.totalorder %s18, 1
      %p162 = scmp.ne.s32.totalorder %s157, %s159
      %p163 = scmp.eq.s32.totalorder %s18, 0
      %p164 = por %p162, %p163
      %p165 = scmp.ne.s32.totalorder %s157, %s159
      %p166 = scmp.eq.s32.totalorder %s23, 1
      %p167 = por %p165, %p166
      %p168 = scmp.ne.s32.totalorder %s159, %s160
      %p169 = scmp.eq.s32.totalorder %s23, 0
      %p170 = por %p168, %p169
      %p171 = scmp.ne.s32.totalorder %s159, %s160
      %p172 = scmp.eq.s32.totalorder %s24, 1
      %p173 = por %p171, %p172
      %p175 = scmp.ne.s32.totalorder %s160, %s174
      %p176 = scmp.eq.s32.totalorder %s24, 0
      %p177 = por %p175, %p176
      %s178 = ssub.s32 %s18, %s25
      %p179 = scmp.eq.s32.totalorder %s178, 0
      %s181 = sadd.s32 %s180, 1
      %s182 = scalar_select %p179, %s180, %s181
      %p185 = pneg %p179
      %p186 = scmp.eq.s32.totalorder %s18, 1
      %p187 = por %p185, %p186
      %p188 = scmp.ne.s32.totalorder %s180, %s183
      %p189 = scmp.eq.s32.totalorder %s18, 0
      %p190 = por %p188, %p189
      %p191 = scmp.ne.s32.totalorder %s180, %s183
      %p192 = scmp.eq.s32.totalorder %s23, 1
      %p193 = por %p191, %p192
      %p194 = scmp.ne.s32.totalorder %s183, %s184
      %p195 = scmp.eq.s32.totalorder %s23, 0
      %p196 = por %p194, %p195
      %p197 = scmp.ne.s32.totalorder %s183, %s184
      %p198 = scmp.eq.s32.totalorder %s24, 1
      %p199 = por %p197, %p198
      %p201 = scmp.ne.s32.totalorder %s184, %s200
      %p202 = scmp.eq.s32.totalorder %s24, 0
      %p203 = por %p201, %p202
      %p204 = scmp.le.s32.totalorder 1, %s18
      %p205 = scmp.lt.s32.totalorder %s18, 3
      %p206 = pnand %p204, %p205
      %p207 = pneg %p206
      // Predicated region
      $region9: #{tpu_custom_call.1} parent=5 // pred_check
        _
      $region10: #{tpu_custom_call.1} parent=5 // pred_check_branch
        %209 = sbr.rel (%p206) target = $region12
      $region11: #{tpu_custom_call.1} parent=5 // pred_region
        %s210 = ssub.s32 %s18, 1
        // Predicated region
        $region13: #{tpu_custom_call.1} parent=11 // pred_check
          %p211 = pneg %p65
        $region14: #{tpu_custom_call.1} parent=11 // pred_check_branch
          %213 = sbr.rel (%p211) target = $region16
        $region15: #{tpu_custom_call.1} parent=11 // pred_region
          _
        $region16: #{tpu_custom_call.1} parent=11 // pred_fallthru
          _
        // Predicated region
        $region17: #{tpu_custom_call.1} parent=11 // pred_check
          %p214 = pneg %p86
        $region18: #{tpu_custom_call.1} parent=11 // pred_check_branch
          %216 = sbr.rel (%p214) target = $region20
        $region19: #{tpu_custom_call.1} parent=11 // pred_region
          _
        $region20: #{tpu_custom_call.1} parent=11 // pred_fallthru
          _
        // Predicated region
        $region21: #{tpu_custom_call.1} parent=11 // pred_check
          %p217 = pneg %p107
        $region22: #{tpu_custom_call.1} parent=11 // pred_check_branch
          %219 = sbr.rel (%p217) target = $region24
        $region23: #{tpu_custom_call.1} parent=11 // pred_region
          _
        $region24: #{tpu_custom_call.1} parent=11 // pred_fallthru
          _
        // Predicated region
        $region25: #{tpu_custom_call.1} parent=11 // pred_check
          %p220 = pneg %p128
        $region26: #{tpu_custom_call.1} parent=11 // pred_check_branch
          %222 = sbr.rel (%p220) target = $region28
        $region27: #{tpu_custom_call.1} parent=11 // pred_region
          _
        $region28: #{tpu_custom_call.1} parent=11 // pred_fallthru
          _
        // Predicated region
        $region29: #{tpu_custom_call.1} parent=11 // pred_check
          %p223 = pneg %p149
        $region30: #{tpu_custom_call.1} parent=11 // pred_check_branch
          %225 = sbr.rel (%p223) target = $region32
        $region31: #{tpu_custom_call.1} parent=11 // pred_region
          _
        $region32: #{tpu_custom_call.1} parent=11 // pred_fallthru
          _
        // Predicated region
        $region33: #{tpu_custom_call.1} parent=11 // pred_check
          %p226 = pneg %p170
        $region34: #{tpu_custom_call.1} parent=11 // pred_check_branch
          %228 = sbr.rel (%p226) target = $region36
        $region35: #{tpu_custom_call.1} parent=11 // pred_region
          _
        $region36: #{tpu_custom_call.1} parent=11 // pred_fallthru
          _
      $region12: #{tpu_custom_call.1} parent=5 // pred_fallthru
        _
      %p229 = scmp.lt.s32.totalorder %s18, 2
      // Predicated region
      $region37: #{tpu_custom_call.1} parent=5 // pred_check
        %p230 = pneg %p229
      $region38: #{tpu_custom_call.1} parent=5 // pred_check_branch
        %232 = sbr.rel (%p230) target = $region40
      $region39: #{tpu_custom_call.1} parent=5 // pred_region
        // Predicated region
        $region41: #{tpu_custom_call.1} parent=39 // pred_check
          %p233 = pneg %p38
        $region42: #{tpu_custom_call.1} parent=39 // pred_check_branch
          %235 = sbr.rel (%p233) target = $region44
        $region43: #{tpu_custom_call.1} parent=39 // pred_region
          %s236 = smul.u32 32, %s18
          %p237 = scmp.lt.s32.totalorder %s236, 63
          %s238 = scalar_select %p237, %s236, 63
          %s239 = smul.addr %s238, 8
          %s240 = scalar_lea.vmem %s0, %s239
          %s241 = smul.u32 32, %s18
        $region44: #{tpu_custom_call.1} parent=39 // pred_fallthru
          _
      $region40: #{tpu_custom_call.1} parent=5 // pred_fallthru
        _
      %p242 = scmp.le.s32.totalorder 1, %s18
      %p243 = scmp.lt.s32.totalorder %s18, 3
      %p244 = pnand %p242, %p243
      %p245 = pneg %p244
      // Predicated region
      $region45: #{tpu_custom_call.1} parent=5 // pred_check
        _
      $region46: #{tpu_custom_call.1} parent=5 // pred_check_branch
        %247 = sbr.rel (%p244) target = $region48
      $region47: #{tpu_custom_call.1} parent=5 // pred_region
        %s248 = ssub.s32 %s18, 1
        %s249 = smul.u32 32, %s23
        %p250 = scmp.lt.s32.totalorder %s249, 63
        %s251 = scalar_select %p250, %s249, 63
        %s252 = smul.addr %s251, 8
        %s253 = scalar_lea.vmem %s0, %s252
        %p254 = pneg %p44
        %p255 = pneg %p41
        %p256 = pneg %p65
        %p257 = pneg %p62
        %p258 = pneg %p86
        %p259 = pneg %p83
        %p260 = pneg %p107
        %p261 = pneg %p104
        %p262 = pneg %p128
        %p263 = pneg %p125
        %p264 = pneg %p149
        %p265 = pneg %p146
        %p266 = pneg %p170
        %p267 = pneg %p167
        %p268 = pneg %p196
        %p269 = pneg %p193
        %s270 = sand.u32 %s183, 1
        %s271 = scalar_lea.sflag [#allocation4], %s270
        %s272 = sand.u32 %s183, 1
        %s273 = smul.addr %s272, 2
        %s274 = scalar_lea.vmem [#allocation3], %s273
        %s275 = smul.u32 32, %s23
        %p276 = scmp.lt.s32.totalorder %s275, 63
        %s277 = scalar_select %p276, %s275, 63
        %s278 = smul.addr %s277, 8
        %s279 = scalar_lea.vmem %s0, %s278
        %s280 = smul.u32 32, %s23
        %v281 = vld [vmem:[%s279] sm:$0xff]
        %v282 = vld [vmem:[%s279 + $0x8] sm:$0xff]
        %v283 = vld [vmem:[%s279 + $0x10] sm:$0xff]
        %v284 = vld [vmem:[%s279 + $0x18] sm:$0xff]
        %v285 = vld [vmem:[%s279 + $0x20] sm:$0xff]
        %v286 = vld [vmem:[%s279 + $0x28] sm:$0xff]
        %v287 = vld [vmem:[%s279 + $0x30] sm:$0xff]
        %v288 = vld [vmem:[%s279 + $0x38] sm:$0xff]
        %v289 = vld [vmem:[%s279 + $0x40] sm:$0xff]
        %v290 = vld [vmem:[%s279 + $0x48] sm:$0xff]
        %v291 = vld [vmem:[%s279 + $0x50] sm:$0xff]
        %v292 = vld [vmem:[%s279 + $0x58] sm:$0xff]
        %v293 = vld [vmem:[%s279 + $0x60] sm:$0xff]
        %v294 = vld [vmem:[%s279 + $0x68] sm:$0xff]
        %v295 = vld [vmem:[%s279 + $0x70] sm:$0xff]
        %v296 = vld [vmem:[%s279 + $0x78] sm:$0xff]
        %v297 = vld [vmem:[%s279 + $0x80] sm:$0xff]
        %v298 = vld [vmem:[%s279 + $0x88] sm:$0xff]
        %v299 = vld [vmem:[%s279 + $0x90] sm:$0xff]
        %v300 = vld [vmem:[%s279 + $0x98] sm:$0xff]
        %v301 = vld [vmem:[%s279 + $0xa0] sm:$0xff]
        %v302 = vld [vmem:[%s279 + $0xa8] sm:$0xff]
        %v303 = vld [vmem:[%s279 + $0xb0] sm:$0xff]
        %v304 = vld [vmem:[%s279 + $0xb8] sm:$0xff]
        %v305 = vld [vmem:[%s279 + $0xc0] sm:$0xff]
        %v306 = vld [vmem:[%s279 + $0xc8] sm:$0xff]
        %v307 = vld [vmem:[%s279 + $0xd0] sm:$0xff]
        %v308 = vld [vmem:[%s279 + $0xd8] sm:$0xff]
        %v309 = vld [vmem:[%s279 + $0xe0] sm:$0xff]
        %v310 = vld [vmem:[%s279 + $0xe8] sm:$0xff]
        %v311 = vld [vmem:[%s279 + $0xf0] sm:$0xff]
        %v312 = vld [vmem:[%s279 + $0xf8] sm:$0xff]
        %v313 = vld [vmem:[%s1] sm:$0xff]
        %v314 = vld [vmem:[%s1 + $0x8] sm:$0xff]
        %v315 = vld [vmem:[%s1 + $0x10] sm:$0xff]
        %v316 = vld [vmem:[%s1 + $0x18] sm:$0xff]
        %v317 = vld [vmem:[%s2] sm:$0x1]
        %v319 = vperm.slane %v317, 0
        %vm321 = vcmask 261120
        %v323 = vsel %vm321, %v281, 0
        %v326 = vsel %vm321, %v282, 0
        %v329 = vsel %vm321, %v283, 0
        %v332 = vsel %vm321, %v284, 0
        %v335 = vsel %vm321, %v285, 0
        %v338 = vsel %vm321, %v286, 0
        %v341 = vsel %vm321, %v287, 0
        %v344 = vsel %vm321, %v288, 0
        %v347 = vsel %vm321, %v289, 0
        %v350 = vsel %vm321, %v290, 0
        %v353 = vsel %vm321, %v291, 0
        %v356 = vsel %vm321, %v292, 0
        %v359 = vsel %vm321, %v293, 0
        %v362 = vsel %vm321, %v294, 0
        %v365 = vsel %vm321, %v295, 0
        %v368 = vsel %vm321, %v296, 0
        %v371 = vsel %vm321, %v297, 0
        %v374 = vsel %vm321, %v298, 0
        %v377 = vsel %vm321, %v299, 0
        %v380 = vsel %vm321, %v300, 0
        %v383 = vsel %vm321, %v301, 0
        %v386 = vsel %vm321, %v302, 0
        %v389 = vsel %vm321, %v303, 0
        %v392 = vsel %vm321, %v304, 0
        %v395 = vsel %vm321, %v305, 0
        %v398 = vsel %vm321, %v306, 0
        %v401 = vsel %vm321, %v307, 0
        %v404 = vsel %vm321, %v308, 0
        %v407 = vsel %vm321, %v309, 0
        %v410 = vsel %vm321, %v310, 0
        %v413 = vsel %vm321, %v311, 0
        %v416 = vsel %vm321, %v312, 0
        %418 = vmatpush.msra.mxu0 0.0
        %419 = vmatpush.msra.mxu0 0.0
        %420 = vmatpush.msra.mxu0 0.0
        %421 = vmatpush.msra.mxu0 0.0
        %422 = vmatpush.msra.mxu0 0.0
        %423 = vmatpush.msra.mxu0 0.0
        %424 = vmatpush.msra.mxu0 0.0
        %425 = vmatpush.msra.mxu0 0.0
        %426 = vmatpush.msra.mxu0 0.0
        %427 = vmatpush.msra.mxu0 0.0
        %428 = vmatpush.msra.mxu0 0.0
        %429 = vmatpush.msra.mxu0 0.0
        %430 = vmatpush.msra.mxu0 %v316
        %431 = vmatpush.msra.mxu0 %v315
        %432 = vmatpush.msra.mxu0 %v314
        %433 = vmatpush.msra.mxu0 %v313
        %434 = vmatmul.f32.gmra.mxu0 %v323
        %v435 = vpop.f32.mrf.mxu0
        %v436 = vadd.f32 %v319, %v435
        %437 = vmatmul.f32.gmra.mxu0 %v326
        %v438 = vpop.f32.mrf.mxu0
        %v439 = vadd.f32 %v319, %v438
        %440 = vmatmul.f32.gmra.mxu0 %v329
        %v441 = vpop.f32.mrf.mxu0
        %v442 = vadd.f32 %v319, %v441
        %443 = vmatmul.f32.gmra.mxu0 %v332
        %v444 = vpop.f32.mrf.mxu0
        %v445 = vadd.f32 %v319, %v444
        %446 = vmatmul.f32.gmra.mxu0 %v335
        %v447 = vpop.f32.mrf.mxu0
        %v448 = vadd.f32 %v319, %v447
        %449 = vmatmul.f32.gmra.mxu0 %v338
        %v450 = vpop.f32.mrf.mxu0
        %v451 = vadd.f32 %v319, %v450
        %452 = vmatmul.f32.gmra.mxu0 %v341
        %v453 = vpop.f32.mrf.mxu0
        %v454 = vadd.f32 %v319, %v453
        %455 = vmatmul.f32.gmra.mxu0 %v344
        %v456 = vpop.f32.mrf.mxu0
        %v457 = vadd.f32 %v319, %v456
        %458 = vmatmul.f32.gmra.mxu0 %v347
        %v459 = vpop.f32.mrf.mxu0
        %v460 = vadd.f32 %v319, %v459
        %461 = vmatmul.f32.gmra.mxu0 %v350
        %v462 = vpop.f32.mrf.mxu0
        %v463 = vadd.f32 %v319, %v462
        %464 = vmatmul.f32.gmra.mxu0 %v353
        %v465 = vpop.f32.mrf.mxu0
        %v466 = vadd.f32 %v319, %v465
        %467 = vmatmul.f32.gmra.mxu0 %v356
        %v468 = vpop.f32.mrf.mxu0
        %v469 = vadd.f32 %v319, %v468
        %470 = vmatmul.f32.gmra.mxu0 %v359
        %v471 = vpop.f32.mrf.mxu0
        %v472 = vadd.f32 %v319, %v471
        %473 = vmatmul.f32.gmra.mxu0 %v362
        %v474 = vpop.f32.mrf.mxu0
        %v475 = vadd.f32 %v319, %v474
        %476 = vmatmul.f32.gmra.mxu0 %v365
        %v477 = vpop.f32.mrf.mxu0
        %v478 = vadd.f32 %v319, %v477
        %479 = vmatmul.f32.gmra.mxu0 %v368
        %v480 = vpop.f32.mrf.mxu0
        %v481 = vadd.f32 %v319, %v480
        %482 = vmatmul.f32.gmra.mxu0 %v371
        %v483 = vpop.f32.mrf.mxu0
        %v484 = vadd.f32 %v319, %v483
        %485 = vmatmul.f32.gmra.mxu0 %v374
        %v486 = vpop.f32.mrf.mxu0
        %v487 = vadd.f32 %v319, %v486
        %488 = vmatmul.f32.gmra.mxu0 %v377
        %v489 = vpop.f32.mrf.mxu0
        %v490 = vadd.f32 %v319, %v489
        %491 = vmatmul.f32.gmra.mxu0 %v380
        %v492 = vpop.f32.mrf.mxu0
        %v493 = vadd.f32 %v319, %v492
        %494 = vmatmul.f32.gmra.mxu0 %v383
        %v495 = vpop.f32.mrf.mxu0
        %v496 = vadd.f32 %v319, %v495
        %497 = vmatmul.f32.gmra.mxu0 %v386
        %v498 = vpop.f32.mrf.mxu0
        %v499 = vadd.f32 %v319, %v498
        %500 = vmatmul.f32.gmra.mxu0 %v389
        %v501 = vpop.f32.mrf.mxu0
        %v502 = vadd.f32 %v319, %v501
        %503 = vmatmul.f32.gmra.mxu0 %v392
        %v504 = vpop.f32.mrf.mxu0
        %v505 = vadd.f32 %v319, %v504
        %506 = vmatmul.f32.gmra.mxu0 %v395
        %v507 = vpop.f32.mrf.mxu0
        %v508 = vadd.f32 %v319, %v507
        %509 = vmatmul.f32.gmra.mxu0 %v398
        %v510 = vpop.f32.mrf.mxu0
        %v511 = vadd.f32 %v319, %v510
        %512 = vmatmul.f32.gmra.mxu0 %v401
        %v513 = vpop.f32.mrf.mxu0
        %v514 = vadd.f32 %v319, %v513
        %515 = vmatmul.f32.gmra.mxu0 %v404
        %v516 = vpop.f32.mrf.mxu0
        %v517 = vadd.f32 %v319, %v516
        %518 = vmatmul.f32.gmra.mxu0 %v407
        %v519 = vpop.f32.mrf.mxu0
        %v520 = vadd.f32 %v319, %v519
        %521 = vmatmul.f32.gmra.mxu0 %v410
        %v522 = vpop.f32.mrf.mxu0
        %v523 = vadd.f32 %v319, %v522
        %524 = vmatmul.f32.gmra.mxu0 %v413
        %v525 = vpop.f32.mrf.mxu0
        %v526 = vadd.f32 %v319, %v525
        %527 = vmatmul.f32.gmra.mxu0 %v416
        %v528 = vpop.f32.mrf.mxu0
        %v529 = vadd.f32 %v319, %v528
        %530 = vdwg.mxu0
        %vm531 = vcmp.gt.f32.partialorder %v436, 0.0
        %vm532 = vcmp.gt.f32.partialorder %v439, 0.0
        %vm533 = vcmp.gt.f32.partialorder %v442, 0.0
        %vm534 = vcmp.gt.f32.partialorder %v445, 0.0
        %vm535 = vcmp.gt.f32.partialorder %v448, 0.0
        %vm536 = vcmp.gt.f32.partialorder %v451, 0.0
        %vm537 = vcmp.gt.f32.partialorder %v454, 0.0
        %vm538 = vcmp.gt.f32.partialorder %v457, 0.0
        %vm539 = vcmp.gt.f32.partialorder %v460, 0.0
        %vm540 = vcmp.gt.f32.partialorder %v463, 0.0
        %vm541 = vcmp.gt.f32.partialorder %v466, 0.0
        %vm542 = vcmp.gt.f32.partialorder %v469, 0.0
        %vm543 = vcmp.gt.f32.partialorder %v472, 0.0
        %vm544 = vcmp.gt.f32.partialorder %v475, 0.0
        %vm545 = vcmp.gt.f32.partialorder %v478, 0.0
        %vm546 = vcmp.gt.f32.partialorder %v481, 0.0
        %vm547 = vcmp.gt.f32.partialorder %v484, 0.0
        %vm548 = vcmp.gt.f32.partialorder %v487, 0.0
        %vm549 = vcmp.gt.f32.partialorder %v490, 0.0
        %vm550 = vcmp.gt.f32.partialorder %v493, 0.0
        %vm551 = vcmp.gt.f32.partialorder %v496, 0.0
        %vm552 = vcmp.gt.f32.partialorder %v499, 0.0
        %vm553 = vcmp.gt.f32.partialorder %v502, 0.0
        %vm554 = vcmp.gt.f32.partialorder %v505, 0.0
        %vm555 = vcmp.gt.f32.partialorder %v508, 0.0
        %vm556 = vcmp.gt.f32.partialorder %v511, 0.0
        %vm557 = vcmp.gt.f32.partialorder %v514, 0.0
        %vm558 = vcmp.gt.f32.partialorder %v517, 0.0
        %vm559 = vcmp.gt.f32.partialorder %v520, 0.0
        %vm560 = vcmp.gt.f32.partialorder %v523, 0.0
        %vm561 = vcmp.gt.f32.partialorder %v526, 0.0
        %vm562 = vcmp.gt.f32.partialorder %v529, 0.0
        %v563 = vmul.f32 %v436, 0.01
        %v564 = vmul.f32 %v439, 0.01
        %v565 = vmul.f32 %v442, 0.01
        %v566 = vmul.f32 %v445, 0.01
        %v567 = vmul.f32 %v448, 0.01
        %v568 = vmul.f32 %v451, 0.01
        %v569 = vmul.f32 %v454, 0.01
        %v570 = vmul.f32 %v457, 0.01
        %v571 = vmul.f32 %v460, 0.01
        %v572 = vmul.f32 %v463, 0.01
        %v573 = vmul.f32 %v466, 0.01
        %v574 = vmul.f32 %v469, 0.01
        %v575 = vmul.f32 %v472, 0.01
        %v576 = vmul.f32 %v475, 0.01
        %v577 = vmul.f32 %v478, 0.01
        %v578 = vmul.f32 %v481, 0.01
        %v579 = vmul.f32 %v484, 0.01
        %v580 = vmul.f32 %v487, 0.01
        %v581 = vmul.f32 %v490, 0.01
        %v582 = vmul.f32 %v493, 0.01
        %v583 = vmul.f32 %v496, 0.01
        %v584 = vmul.f32 %v499, 0.01
        %v585 = vmul.f32 %v502, 0.01
        %v586 = vmul.f32 %v505, 0.01
        %v587 = vmul.f32 %v508, 0.01
        %v588 = vmul.f32 %v511, 0.01
        %v589 = vmul.f32 %v514, 0.01
        %v590 = vmul.f32 %v517, 0.01
        %v591 = vmul.f32 %v520, 0.01
        %v592 = vmul.f32 %v523, 0.01
        %v593 = vmul.f32 %v526, 0.01
        %v594 = vmul.f32 %v529, 0.01
        %v595 = vsel %vm531, %v436, %v563
        %v596 = vsel %vm532, %v439, %v564
        %v597 = vsel %vm533, %v442, %v565
        %v598 = vsel %vm534, %v445, %v566
        %v599 = vsel %vm535, %v448, %v567
        %v600 = vsel %vm536, %v451, %v568
        %v601 = vsel %vm537, %v454, %v569
        %v602 = vsel %vm538, %v457, %v570
        %v603 = vsel %vm539, %v460, %v571
        %v604 = vsel %vm540, %v463, %v572
        %v605 = vsel %vm541, %v466, %v573
        %v606 = vsel %vm542, %v469, %v574
        %v607 = vsel %vm543, %v472, %v575
        %v608 = vsel %vm544, %v475, %v576
        %v609 = vsel %vm545, %v478, %v577
        %v610 = vsel %vm546, %v481, %v578
        %v611 = vsel %vm547, %v484, %v579
        %v612 = vsel %vm548, %v487, %v580
        %v613 = vsel %vm549, %v490, %v581
        %v614 = vsel %vm550, %v493, %v582
        %v615 = vsel %vm551, %v496, %v583
        %v616 = vsel %vm552, %v499, %v584
        %v617 = vsel %vm553, %v502, %v585
        %v618 = vsel %vm554, %v505, %v586
        %v619 = vsel %vm555, %v508, %v587
        %v620 = vsel %vm556, %v511, %v588
        %v621 = vsel %vm557, %v514, %v589
        %v622 = vsel %vm558, %v517, %v590
        %v623 = vsel %vm559, %v520, %v591
        %v624 = vsel %vm560, %v523, %v592
        %v625 = vsel %vm561, %v526, %v593
        %v626 = vsel %vm562, %v529, %v594
        %v627 = vld [vmem:[%s3] sm:$0xff]
        %v628 = vld [vmem:[%s3 + $0x8] sm:$0xff]
        %v629 = vld [vmem:[%s3 + $0x10] sm:$0xff]
        %v630 = vld [vmem:[%s3 + $0x18] sm:$0xff]
        %v631 = vld [vmem:[%s3 + $0x20] sm:$0xff]
        %v632 = vld [vmem:[%s3 + $0x28] sm:$0xff]
        %v633 = vld [vmem:[%s3 + $0x30] sm:$0xff]
        %v634 = vld [vmem:[%s3 + $0x38] sm:$0xff]
        %v635 = vld [vmem:[%s4] sm:$0x1]
        %v637 = vperm.slane %v635, 0
        %vm639 = vcmask 523264
        %v641 = vsel %vm639, %v595, 0
        %v644 = vsel %vm639, %v596, 0
        %v647 = vsel %vm639, %v597, 0
        %v650 = vsel %vm639, %v598, 0
        %v653 = vsel %vm639, %v599, 0
        %v656 = vsel %vm639, %v600, 0
        %v659 = vsel %vm639, %v601, 0
        %v662 = vsel %vm639, %v602, 0
        %v665 = vsel %vm639, %v603, 0
        %v668 = vsel %vm639, %v604, 0
        %v671 = vsel %vm639, %v605, 0
        %v674 = vsel %vm639, %v606, 0
        %v677 = vsel %vm639, %v607, 0
        %v680 = vsel %vm639, %v608, 0
        %v683 = vsel %vm639, %v609, 0
        %v686 = vsel %vm639, %v610, 0
        %v689 = vsel %vm639, %v611, 0
        %v692 = vsel %vm639, %v612, 0
        %v695 = vsel %vm639, %v613, 0
        %v698 = vsel %vm639, %v614, 0
        %v701 = vsel %vm639, %v615, 0
        %v704 = vsel %vm639, %v616, 0
        %v707 = vsel %vm639, %v617, 0
        %v710 = vsel %vm639, %v618, 0
        %v713 = vsel %vm639, %v619, 0
        %v716 = vsel %vm639, %v620, 0
        %v719 = vsel %vm639, %v621, 0
        %v722 = vsel %vm639, %v622, 0
        %v725 = vsel %vm639, %v623, 0
        %v728 = vsel %vm639, %v624, 0
        %v731 = vsel %vm639, %v625, 0
        %v734 = vsel %vm639, %v626, 0
        %736 = vmatpush.msra.mxu0 0.0
        %737 = vmatpush.msra.mxu0 0.0
        %738 = vmatpush.msra.mxu0 0.0
        %739 = vmatpush.msra.mxu0 0.0
        %740 = vmatpush.msra.mxu0 0.0
        %741 = vmatpush.msra.mxu0 0.0
        %742 = vmatpush.msra.mxu0 0.0
        %743 = vmatpush.msra.mxu0 0.0
        %744 = vmatpush.msra.mxu0 %v634
        %745 = vmatpush.msra.mxu0 %v633
        %746 = vmatpush.msra.mxu0 %v632
        %747 = vmatpush.msra.mxu0 %v631
        %748 = vmatpush.msra.mxu0 %v630
        %749 = vmatpush.msra.mxu0 %v629
        %750 = vmatpush.msra.mxu0 %v628
        %751 = vmatpush.msra.mxu0 %v627
        %752 = vmatmul.f32.gmra.mxu0 %v641
        %v753 = vpop.f32.mrf.mxu0
        %v754 = vadd.f32 %v637, %v753
        %755 = vmatmul.f32.gmra.mxu0 %v644
        %v756 = vpop.f32.mrf.mxu0
        %v757 = vadd.f32 %v637, %v756
        %758 = vmatmul.f32.gmra.mxu0 %v647
        %v759 = vpop.f32.mrf.mxu0
        %v760 = vadd.f32 %v637, %v759
        %761 = vmatmul.f32.gmra.mxu0 %v650
        %v762 = vpop.f32.mrf.mxu0
        %v763 = vadd.f32 %v637, %v762
        %764 = vmatmul.f32.gmra.mxu0 %v653
        %v765 = vpop.f32.mrf.mxu0
        %v766 = vadd.f32 %v637, %v765
        %767 = vmatmul.f32.gmra.mxu0 %v656
        %v768 = vpop.f32.mrf.mxu0
        %v769 = vadd.f32 %v637, %v768
        %770 = vmatmul.f32.gmra.mxu0 %v659
        %v771 = vpop.f32.mrf.mxu0
        %v772 = vadd.f32 %v637, %v771
        %773 = vmatmul.f32.gmra.mxu0 %v662
        %v774 = vpop.f32.mrf.mxu0
        %v775 = vadd.f32 %v637, %v774
        %776 = vmatmul.f32.gmra.mxu0 %v665
        %v777 = vpop.f32.mrf.mxu0
        %v778 = vadd.f32 %v637, %v777
        %779 = vmatmul.f32.gmra.mxu0 %v668
        %v780 = vpop.f32.mrf.mxu0
        %v781 = vadd.f32 %v637, %v780
        %782 = vmatmul.f32.gmra.mxu0 %v671
        %v783 = vpop.f32.mrf.mxu0
        %v784 = vadd.f32 %v637, %v783
        %785 = vmatmul.f32.gmra.mxu0 %v674
        %v786 = vpop.f32.mrf.mxu0
        %v787 = vadd.f32 %v637, %v786
        %788 = vmatmul.f32.gmra.mxu0 %v677
        %v789 = vpop.f32.mrf.mxu0
        %v790 = vadd.f32 %v637, %v789
        %791 = vmatmul.f32.gmra.mxu0 %v680
        %v792 = vpop.f32.mrf.mxu0
        %v793 = vadd.f32 %v637, %v792
        %794 = vmatmul.f32.gmra.mxu0 %v683
        %v795 = vpop.f32.mrf.mxu0
        %v796 = vadd.f32 %v637, %v795
        %797 = vmatmul.f32.gmra.mxu0 %v686
        %v798 = vpop.f32.mrf.mxu0
        %v799 = vadd.f32 %v637, %v798
        %800 = vmatmul.f32.gmra.mxu0 %v689
        %v801 = vpop.f32.mrf.mxu0
        %v802 = vadd.f32 %v637, %v801
        %803 = vmatmul.f32.gmra.mxu0 %v692
        %v804 = vpop.f32.mrf.mxu0
        %v805 = vadd.f32 %v637, %v804
        %806 = vmatmul.f32.gmra.mxu0 %v695
        %v807 = vpop.f32.mrf.mxu0
        %v808 = vadd.f32 %v637, %v807
        %809 = vmatmul.f32.gmra.mxu0 %v698
        %v810 = vpop.f32.mrf.mxu0
        %v811 = vadd.f32 %v637, %v810
        %812 = vmatmul.f32.gmra.mxu0 %v701
        %v813 = vpop.f32.mrf.mxu0
        %v814 = vadd.f32 %v637, %v813
        %815 = vmatmul.f32.gmra.mxu0 %v704
        %v816 = vpop.f32.mrf.mxu0
        %v817 = vadd.f32 %v637, %v816
        %818 = vmatmul.f32.gmra.mxu0 %v707
        %v819 = vpop.f32.mrf.mxu0
        %v820 = vadd.f32 %v637, %v819
        %821 = vmatmul.f32.gmra.mxu0 %v710
        %v822 = vpop.f32.mrf.mxu0
        %v823 = vadd.f32 %v637, %v822
        %824 = vmatmul.f32.gmra.mxu0 %v713
        %v825 = vpop.f32.mrf.mxu0
        %v826 = vadd.f32 %v637, %v825
        %827 = vmatmul.f32.gmra.mxu0 %v716
        %v828 = vpop.f32.mrf.mxu0
        %v829 = vadd.f32 %v637, %v828
        %830 = vmatmul.f32.gmra.mxu0 %v719
        %v831 = vpop.f32.mrf.mxu0
        %v832 = vadd.f32 %v637, %v831
        %833 = vmatmul.f32.gmra.mxu0 %v722
        %v834 = vpop.f32.mrf.mxu0
        %v835 = vadd.f32 %v637, %v834
        %836 = vmatmul.f32.gmra.mxu0 %v725
        %v837 = vpop.f32.mrf.mxu0
        %v838 = vadd.f32 %v637, %v837
        %839 = vmatmul.f32.gmra.mxu0 %v728
        %v840 = vpop.f32.mrf.mxu0
        %v841 = vadd.f32 %v637, %v840
        %842 = vmatmul.f32.gmra.mxu0 %v731
        %v843 = vpop.f32.mrf.mxu0
        %v844 = vadd.f32 %v637, %v843
        %845 = vmatmul.f32.gmra.mxu0 %v734
        %v846 = vpop.f32.mrf.mxu0
        %v847 = vadd.f32 %v637, %v846
        %848 = vdwg.mxu0
        %vm849 = vcmp.gt.f32.partialorder %v754, 0.0
        %vm850 = vcmp.gt.f32.partialorder %v757, 0.0
        %vm851 = vcmp.gt.f32.partialorder %v760, 0.0
        %vm852 = vcmp.gt.f32.partialorder %v763, 0.0
        %vm853 = vcmp.gt.f32.partialorder %v766, 0.0
        %vm854 = vcmp.gt.f32.partialorder %v769, 0.0
        %vm855 = vcmp.gt.f32.partialorder %v772, 0.0
        %vm856 = vcmp.gt.f32.partialorder %v775, 0.0
        %vm857 = vcmp.gt.f32.partialorder %v778, 0.0
        %vm858 = vcmp.gt.f32.partialorder %v781, 0.0
        %vm859 = vcmp.gt.f32.partialorder %v784, 0.0
        %vm860 = vcmp.gt.f32.partialorder %v787, 0.0
        %vm861 = vcmp.gt.f32.partialorder %v790, 0.0
        %vm862 = vcmp.gt.f32.partialorder %v793, 0.0
        %vm863 = vcmp.gt.f32.partialorder %v796, 0.0
        %vm864 = vcmp.gt.f32.partialorder %v799, 0.0
        %vm865 = vcmp.gt.f32.partialorder %v802, 0.0
        %vm866 = vcmp.gt.f32.partialorder %v805, 0.0
        %vm867 = vcmp.gt.f32.partialorder %v808, 0.0
        %vm868 = vcmp.gt.f32.partialorder %v811, 0.0
        %vm869 = vcmp.gt.f32.partialorder %v814, 0.0
        %vm870 = vcmp.gt.f32.partialorder %v817, 0.0
        %vm871 = vcmp.gt.f32.partialorder %v820, 0.0
        %vm872 = vcmp.gt.f32.partialorder %v823, 0.0
        %vm873 = vcmp.gt.f32.partialorder %v826, 0.0
        %vm874 = vcmp.gt.f32.partialorder %v829, 0.0
        %vm875 = vcmp.gt.f32.partialorder %v832, 0.0
        %vm876 = vcmp.gt.f32.partialorder %v835, 0.0
        %vm877 = vcmp.gt.f32.partialorder %v838, 0.0
        %vm878 = vcmp.gt.f32.partialorder %v841, 0.0
        %vm879 = vcmp.gt.f32.partialorder %v844, 0.0
        %vm880 = vcmp.gt.f32.partialorder %v847, 0.0
        %v881 = vmul.f32 %v754, 0.01
        %v882 = vmul.f32 %v757, 0.01
        %v883 = vmul.f32 %v760, 0.01
        %v884 = vmul.f32 %v763, 0.01
        %v885 = vmul.f32 %v766, 0.01
        %v886 = vmul.f32 %v769, 0.01
        %v887 = vmul.f32 %v772, 0.01
        %v888 = vmul.f32 %v775, 0.01
        %v889 = vmul.f32 %v778, 0.01
        %v890 = vmul.f32 %v781, 0.01
        %v891 = vmul.f32 %v784, 0.01
        %v892 = vmul.f32 %v787, 0.01
        %v893 = vmul.f32 %v790, 0.01
        %v894 = vmul.f32 %v793, 0.01
        %v895 = vmul.f32 %v796, 0.01
        %v896 = vmul.f32 %v799, 0.01
        %v897 = vmul.f32 %v802, 0.01
        %v898 = vmul.f32 %v805, 0.01
        %v899 = vmul.f32 %v808, 0.01
        %v900 = vmul.f32 %v811, 0.01
        %v901 = vmul.f32 %v814, 0.01
        %v902 = vmul.f32 %v817, 0.01
        %v903 = vmul.f32 %v820, 0.01
        %v904 = vmul.f32 %v823, 0.01
        %v905 = vmul.f32 %v826, 0.01
        %v906 = vmul.f32 %v829, 0.01
        %v907 = vmul.f32 %v832, 0.01
        %v908 = vmul.f32 %v835, 0.01
        %v909 = vmul.f32 %v838, 0.01
        %v910 = vmul.f32 %v841, 0.01
        %v911 = vmul.f32 %v844, 0.01
        %v912 = vmul.f32 %v847, 0.01
        %v913 = vsel %vm849, %v754, %v881
        %v914 = vsel %vm850, %v757, %v882
        %v915 = vsel %vm851, %v760, %v883
        %v916 = vsel %vm852, %v763, %v884
        %v917 = vsel %vm853, %v766, %v885
        %v918 = vsel %vm854, %v769, %v886
        %v919 = vsel %vm855, %v772, %v887
        %v920 = vsel %vm856, %v775, %v888
        %v921 = vsel %vm857, %v778, %v889
        %v922 = vsel %vm858, %v781, %v890
        %v923 = vsel %vm859, %v784, %v891
        %v924 = vsel %vm860, %v787, %v892
        %v925 = vsel %vm861, %v790, %v893
        %v926 = vsel %vm862, %v793, %v894
        %v927 = vsel %vm863, %v796, %v895
        %v928 = vsel %vm864, %v799, %v896
        %v929 = vsel %vm865, %v802, %v897
        %v930 = vsel %vm866, %v805, %v898
        %v931 = vsel %vm867, %v808, %v899
        %v932 = vsel %vm868, %v811, %v900
        %v933 = vsel %vm869, %v814, %v901
        %v934 = vsel %vm870, %v817, %v902
        %v935 = vsel %vm871, %v820, %v903
        %v936 = vsel %vm872, %v823, %v904
        %v937 = vsel %vm873, %v826, %v905
        %v938 = vsel %vm874, %v829, %v906
        %v939 = vsel %vm875, %v832, %v907
        %v940 = vsel %vm876, %v835, %v908
        %v941 = vsel %vm877, %v838, %v909
        %v942 = vsel %vm878, %v841, %v910
        %v943 = vsel %vm879, %v844, %v911
        %v944 = vsel %vm880, %v847, %v912
        %v945 = vld [vmem:[%s5] sm:$0xff]
        %v947 = vsel %vm321, %v945, 0
        %v950 = vsel %vm321, %v913, 0
        %v953 = vsel %vm321, %v914, 0
        %v956 = vsel %vm321, %v915, 0
        %v959 = vsel %vm321, %v916, 0
        %v962 = vsel %vm321, %v917, 0
        %v965 = vsel %vm321, %v918, 0
        %v968 = vsel %vm321, %v919, 0
        %v971 = vsel %vm321, %v920, 0
        %v974 = vsel %vm321, %v921, 0
        %v977 = vsel %vm321, %v922, 0
        %v980 = vsel %vm321, %v923, 0
        %v983 = vsel %vm321, %v924, 0
        %v986 = vsel %vm321, %v925, 0
        %v989 = vsel %vm321, %v926, 0
        %v992 = vsel %vm321, %v927, 0
        %v995 = vsel %vm321, %v928, 0
        %v998 = vsel %vm321, %v929, 0
        %v1001 = vsel %vm321, %v930, 0
        %v1004 = vsel %vm321, %v931, 0
        %v1007 = vsel %vm321, %v932, 0
        %v1010 = vsel %vm321, %v933, 0
        %v1013 = vsel %vm321, %v934, 0
        %v1016 = vsel %vm321, %v935, 0
        %v1019 = vsel %vm321, %v936, 0
        %v1022 = vsel %vm321, %v937, 0
        %v1025 = vsel %vm321, %v938, 0
        %v1028 = vsel %vm321, %v939, 0
        %v1031 = vsel %vm321, %v940, 0
        %v1034 = vsel %vm321, %v941, 0
        %v1037 = vsel %vm321, %v942, 0
        %v1040 = vsel %vm321, %v943, 0
        %v1043 = vsel %vm321, %v944, 0
        %1045 = vmatpush.xpose.msra.mxu0 %v995
        %1046 = vmatpush.xpose.msra.mxu0 %v992
        %1047 = vmatpush.xpose.msra.mxu0 %v989
        %1048 = vmatpush.xpose.msra.mxu0 %v986
        %1049 = vmatpush.xpose.msra.mxu0 %v983
        %1050 = vmatpush.xpose.msra.mxu0 %v980
        %1051 = vmatpush.xpose.msra.mxu0 %v977
        %1052 = vmatpush.xpose.msra.mxu0 %v974
        %1053 = vmatpush.xpose.msra.mxu0 %v971
        %1054 = vmatpush.xpose.msra.mxu0 %v968
        %1055 = vmatpush.xpose.msra.mxu0 %v965
        %1056 = vmatpush.xpose.msra.mxu0 %v962
        %1057 = vmatpush.xpose.msra.mxu0 %v959
        %1058 = vmatpush.xpose.msra.mxu0 %v956
        %1059 = vmatpush.xpose.msra.mxu0 %v953
        %1060 = vmatpush.xpose.msra.mxu0 %v950
        %1061 = vmatmul.f32.gmra.mxu0 %v947
        %v1062 = vpop.f32.mrf.mxu0
        %v1063 = vadd.f32 0.0, %v1062
        %1064 = vdwg.mxu0
        %1065 = vmatpush.xpose.msra.mxu0 %v1043
        %1066 = vmatpush.xpose.msra.mxu0 %v1040
        %1067 = vmatpush.xpose.msra.mxu0 %v1037
        %1068 = vmatpush.xpose.msra.mxu0 %v1034
        %1069 = vmatpush.xpose.msra.mxu0 %v1031
        %1070 = vmatpush.xpose.msra.mxu0 %v1028
        %1071 = vmatpush.xpose.msra.mxu0 %v1025
        %1072 = vmatpush.xpose.msra.mxu0 %v1022
        %1073 = vmatpush.xpose.msra.mxu0 %v1019
        %1074 = vmatpush.xpose.msra.mxu0 %v1016
        %1075 = vmatpush.xpose.msra.mxu0 %v1013
        %1076 = vmatpush.xpose.msra.mxu0 %v1010
        %1077 = vmatpush.xpose.msra.mxu0 %v1007
        %1078 = vmatpush.xpose.msra.mxu0 %v1004
        %1079 = vmatpush.xpose.msra.mxu0 %v1001
        %1080 = vmatpush.xpose.msra.mxu0 %v998
        %1081 = vmatmul.f32.gmra.mxu0 %v947
        %v1082 = vpop.f32.mrf.mxu0
        %v1083 = vadd.f32 0.0, %v1082
        %1084 = vdwg.mxu0
        %v1085 = vld [vmem:[#allocation2] sm:$0x1]
        %1087 = vset.pattern.permute.xlu0 0
        %1088 = vperm.xlu0 %1087, %v1085
        %v1089 = vpop.permute.xlu0 %1088
        %v1091 = vperm.slane %v1089, 0
        %v1092 = vadd.f32 %v1063, %v1091
        %v1093 = vadd.f32 %v1083, %v1091
        %vm1094 = vcmp.gt.f32.partialorder %v1092, 0.0
        %vm1095 = vcmp.gt.f32.partialorder %v1093, 0.0
        %v1096 = vmul.f32 %v1092, 0.01
        %v1097 = vmul.f32 %v1093, 0.01
        %v1098 = vsel %vm1094, %v1092, %v1096
        %v1099 = vsel %vm1095, %v1093, %v1097
        %v1102 = vrot.slane %v1099, 7
        %vm1103 = vcmask 1040384
        %v1104 = vsel %vm1103, %v1098, %v1102
        %v1106 = vlaneseq
        %vm1107 = vcmp.ge.s32.totalorder %v1106, 0
        %vm1108 = vcmp.lt.s32.totalorder %v1106, 256
        %vm1109 = vmand %vm1107, %vm1108
        %1110 = vst.msk [vmem:[%s274] sm:$0x3] %vm1109, %v1104
        %s1111 = sand.u32 %s183, 1
        %s1112 = scalar_lea.sflag [#allocation4], %s1111
        %s1113 = sand.u32 %s183, 1
        %s1114 = smul.addr %s1113, 2
        %s1115 = scalar_lea.vmem [#allocation3], %s1114
        // Predicated region
        $region49: #{tpu_custom_call.1} parent=47 // pred_check
          %p1116 = pneg %p193
        $region50: #{tpu_custom_call.1} parent=47 // pred_check_branch
          %1118 = sbr.rel (%p1116) target = $region52
        $region51: #{tpu_custom_call.1} parent=47 // pred_region
          %1120 = vsyncadd %s1112, 0
          %s1121 = smul.addr %s23, 2
          %s1122 = scalar_lea.hbm %s7, %s1121
          %s1124 = sshll.u32 %s1115, 4
          %s1125 = int_to_ptr.vmem [resolvable:$true] %s1124
          %s1126 = sshll.u32 %s1122, 4
          %s1127 = int_to_ptr.hbm [resolvable:$true] %s1126
          %1129 = dma.vmem_to_hbm [thread:$0]  %s1125, 32, %s1127, %s1112
        $region52: #{tpu_custom_call.1} parent=47 // pred_fallthru
          _
      $region48: #{tpu_custom_call.1} parent=5 // pred_fallthru
        _
      %p1130 = scmp.le.s32.totalorder 2, %s18
      // Predicated region
      $region53: #{tpu_custom_call.1} parent=5 // pred_check
        %p1131 = pneg %p1130
      $region54: #{tpu_custom_call.1} parent=5 // pred_check_branch
        %1133 = sbr.rel (%p1131) target = $region56
      $region55: #{tpu_custom_call.1} parent=5 // pred_region
        %s1134 = ssub.s32 %s18, 2
        // Predicated region
        $region57: #{tpu_custom_call.1} parent=55 // pred_check
          %p1135 = pneg %p199
        $region58: #{tpu_custom_call.1} parent=55 // pred_check_branch
          %1137 = sbr.rel (%p1135) target = $region60
        $region59: #{tpu_custom_call.1} parent=55 // pred_region
          %s1138 = sand.u32 %s184, 1
          %s1139 = scalar_lea.sflag [#allocation4], %s1138
          %s1140 = sand.u32 %s184, 1
          %s1141 = smul.addr %s1140, 2
          %s1142 = scalar_lea.vmem [#allocation3], %s1141
          %1144 = dma.done %s1139, 32
        $region60: #{tpu_custom_call.1} parent=55 // pred_fallthru
          _
      $region56: #{tpu_custom_call.1} parent=5 // pred_fallthru
        _
    $region6: #{tpu_custom_call.1} parent=1 // loop_footer
      %s22 = sadd.s32 1, %s18
    $region7: #{tpu_custom_call.1} parent=1 // loop_footer_branch
      %17 = sbr.rel target = $region3
    $region8: #{tpu_custom_call.1} parent=1 // loop_exit
      _
    %1145 = vsyncpa [#allocation4], 1
    %s1146 = scalar_lea.sflag [#allocation4], 1
    %1147 = vsyncpa %s1146, 1

</llo_original>
